<compile_context>
chip_gen: v6e
topology: v6e:2x2x1
jax: 0.10.0
libtpu: 0.0.40
codegen_flags: <defaults>
</compile_context>

<pallas_src>
import functools

import jax
import jax.numpy as jnp
from jax import lax
from jax.experimental import pallas as pl
from jax.experimental.pallas import tpu as pltpu

# Module hyper-parameters (AC_FocalLoss.__init__ defaults); no learnable weights.
GAMMA = 2.0
POS_THRES = 0.8
ALPHA = 1.5
MARGIN = 0.0


def _ac_focal_kernel(x_ref, t_ref, out_ref, sloss_ref, saw_ref, shigh_ref, *,
                     gamma, pos_thres, alpha, margin,
                     n_valid_per_batch, n_total, needs_mask):
    b = pl.program_id(0)

    @pl.when(b == 0)
    def _():
        sloss_ref[...] = jnp.zeros_like(sloss_ref)
        saw_ref[...] = jnp.zeros_like(saw_ref)
        shigh_ref[...] = jnp.zeros_like(shigh_ref)

    x = x_ref[0].astype(jnp.float32)      # (rows, lanes)
    t = t_ref[0].astype(jnp.float32)      # (rows, lanes)
    rows, lanes = x.shape

    if needs_mask:
        row_i = lax.broadcasted_iota(jnp.int32, (rows, lanes), 0)
        col_i = lax.broadcasted_iota(jnp.int32, (rows, lanes), 1)
        valid = (row_i * lanes + col_i) < n_valid_per_batch
    else:
        valid = None

    # log_sigmoid(x)      = min(x, 0)  - log(1 + exp(-|x|))
    # log(1 - sigmoid(x)) = min(-x, 0) - log(1 + exp(-|x|))
    # (the +0.5*clamp(x,0,0) terms in the PyTorch code are identically zero)
    e = jnp.exp(-jnp.abs(x))              # single exp per element (EUP)
    log_term = jnp.log1p(e)               # single log per element (EUP)
    pos_log_sig = jnp.minimum(x, 0.0) - log_term
    neg_log_sig = jnp.minimum(-x, 0.0) - log_term

    # sigmoid / (1 - sigmoid) reconstructed from e = exp(-|x|): one divide,
    # no extra exp.
    inv_d = 1.0 / (1.0 + e)
    prob = jnp.where(x >= 0, 1.0, e) * inv_d
    one_m_prob = jnp.where(x >= 0, e, 1.0) * inv_d

    if float(gamma) == 2.0:               # default path: exact squares on VPU
        pos_weight = one_m_prob * one_m_prob
        neg_weight = prob * prob
    else:                                  # generic float exponent fallback
        pos_weight = one_m_prob ** gamma
        neg_weight = prob ** gamma

    loss = -(t * pos_weight * pos_log_sig + (1.0 - t) * neg_weight * neg_log_sig)
    avg_weight = t * pos_weight + (1.0 - t) * neg_weight

    if valid is not None:
        loss = jnp.where(valid, loss, 0.0)
        avg_weight = jnp.where(valid, avg_weight, 0.0)
        x_for_min = jnp.where(valid, x, jnp.inf)
        x_for_max = jnp.where(valid, x, -jnp.inf)
    else:
        x_for_min = x
        x_for_max = x

    # normalize(): per-batch min/max; the grid block holds one full batch row,
    # so this is exactly the np.min/max over (C,H,W) of the reference (C==1).
    x_min = jnp.min(x_for_min, keepdims=True)                    # (1, 1)
    x_max = jnp.max(x_for_max, keepdims=True)                    # (1, 1)
    # (x - min)/(max - min) > thres  <=>  x > min + thres*(max - min)
    thresh = x_min + pos_thres * (x_max - x_min)                 # (1, 1)
    high = x > thresh
    if valid is not None:
        high = jnp.logical_and(high, valid)

    sloss_ref[...] += jnp.sum(loss, keepdims=True)
    saw_ref[...] += jnp.sum(avg_weight, keepdims=True)
    shigh_ref[...] += jnp.sum(high.astype(jnp.float32), keepdims=True)

    @pl.when(b == pl.num_programs(0) - 1)
    def _():
        ac_weight = (1.0 + margin - shigh_ref[...] / n_total) ** alpha
        # mean(loss)/mean(avg_weight) == sum(loss)/sum(avg_weight)
        out_ref[...] = ac_weight * sloss_ref[...] / saw_ref[...]


def ac_focal_loss(inp, target, gamma=GAMMA, pos_thres=POS_THRES,
                  alpha=ALPHA, margin=MARGIN):
    """inp/target: NCHW, C must be 1 (matches the PyTorch module's normalize)."""
    b, c, h, w = inp.shape
    assert c == 1, "AC_FocalLoss.normalize() requires C == 1"
    n = c * h * w

    # Lay each batch row out as (rows, lanes) with lanes a multiple of 128
    # whenever possible so vregs are densely packed.
    lanes = 128 if n >= 128 else n
    rows = pl.cdiv(n, lanes)
    n_pad = rows * lanes
    needs_mask = n_pad != n

    x2 = inp.reshape(b, n)
    t2 = target.reshape(b, n)
    if needs_mask:
        x2 = jnp.pad(x2, ((0, 0), (0, n_pad - n)))
        t2 = jnp.pad(t2, ((0, 0), (0, n_pad - n)))
    x3 = x2.reshape(b, rows, lanes)        # native dtype; cast happens in-kernel
    t3 = t2.reshape(b, rows, lanes)

    kernel = functools.partial(
        _ac_focal_kernel,
        gamma=float(gamma), pos_thres=float(pos_thres),
        alpha=float(alpha), margin=float(margin),
        n_valid_per_batch=n, n_total=float(b * n), needs_mask=needs_mask,
    )

    elems = b * n
    cost = pl.CostEstimate(
        flops=30 * elems,
        transcendentals=3 * elems,
        bytes_accessed=elems * (x3.dtype.itemsize + t3.dtype.itemsize) + 4,
    )

    out = pl.pallas_call(
        kernel,
        out_shape=jax.ShapeDtypeStruct((1, 1), jnp.float32),
        grid_spec=pltpu.PrefetchScalarGridSpec(
            num_scalar_prefetch=0,
            grid=(b,),
            in_specs=[
                pl.BlockSpec((1, rows, lanes), lambda i: (i, 0, 0)),
                pl.BlockSpec((1, rows, lanes), lambda i: (i, 0, 0)),
            ],
            out_specs=pl.BlockSpec((1, 1), lambda i: (0, 0)),
            scratch_shapes=[
                pltpu.VMEM((1, 1), jnp.float32),   # running sum(loss)
                pltpu.VMEM((1, 1), jnp.float32),   # running sum(avg_weight)
                pltpu.VMEM((1, 1), jnp.float32),   # running num_high
            ],
        ),
        compiler_params=pltpu.CompilerParams(
            # Batch axis carries scalar accumulators -> must be "arbitrary".
            dimension_semantics=("arbitrary",),
        ),
        cost_estimate=cost,
    )(x3, t3)
    return out[0, 0]


def _ref_loss(inp, target, gamma=GAMMA, pos_thres=POS_THRES,
              alpha=ALPHA, margin=MARGIN):
    """Pure-JAX reference mirroring the PyTorch forward exactly (C == 1)."""
    x = inp.astype(jnp.float32)
    t = target.astype(jnp.float32)
    abs_term = jnp.log1p(jnp.exp(-jnp.abs(x)))
    pls = jnp.minimum(x, 0.0) - abs_term
    nls = jnp.minimum(-x, 0.0) - abs_term
    prob = jax.nn.sigmoid(x)
    pw = (1.0 - prob) ** gamma
    nw = prob ** gamma
    loss = -(t * pw * pls + (1.0 - t) * nw * nls)
    aw = t * pw + (1.0 - t) * nw
    xmin = jnp.min(x, axis=(2, 3), keepdims=True)
    xmax = jnp.max(x, axis=(2, 3), keepdims=True)
    norm = (x - xmin) / (xmax - xmin)
    num_high = jnp.sum((norm > pos_thres).astype(jnp.float32))
    acw = (1.0 + margin - num_high / x.size) ** alpha
    return acw * jnp.mean(loss) / jnp.mean(aw)


if __name__ == "__main__":
    key = jax.random.PRNGKey(0)
    kx, kt = jax.random.split(key)

    # SiamFC-style response map: batch=2, channels=1, spatial 16x16.
    B, C, H, W = 2, 1, 16, 16
    x = jax.random.normal(kx, (B, C, H, W), dtype=jnp.float32) * 2.0
    t = (jax.random.uniform(kt, (B, C, H, W)) > 0.7).astype(jnp.float32)

    out = ac_focal_loss(x, t)
    out = jax.block_until_ready(out)

    ref = _ref_loss(x, t)
    assert jnp.isfinite(out), out
    assert jnp.allclose(out, ref, rtol=1e-5, atol=1e-5), (out, ref)

    print("KERNEL_OK")
</pallas_src>

<mosaic_0001>
module attributes {stable_mosaic.version = 11 : i64} {
  func.func @_ac_focal_kernel(%arg0: i32, %arg1: memref<1x2x128xf32, #tpu.memory_space<vmem>>, %arg2: memref<1x2x128xf32, #tpu.memory_space<vmem>>, %arg3: memref<1x1xf32, #tpu.memory_space<vmem>>, %arg4: memref<1x1xf32, #tpu.memory_space<vmem>>, %arg5: memref<1x1xf32, #tpu.memory_space<vmem>>, %arg6: memref<1x1xf32, #tpu.memory_space<vmem>>) attributes {dimension_semantics = [#tpu.dimension_semantics<arbitrary>], iteration_bounds = array<i64: 2>, scalar_prefetch = 0 : i64, scratch_operands = 3 : i64, tpu.core_type = #tpu.core_type<tc>, window_params = [{transform_indices = @transform_0, window_bounds = array<i64: 1, 2, 128>}, {transform_indices = @transform_1, window_bounds = array<i64: 1, 2, 128>}, {pipeline_mode = #tpu.pipeline_mode<synchronous>, transform_indices = @transform_2, window_bounds = array<i64: 1, 1>}]} {
    %c0_i32 = arith.constant 0 : i32
    %0 = arith.cmpi eq, %arg0, %c0_i32 : i32
    %1 = arith.extui %0 : i1 to i32
    %c0_i32_0 = arith.constant 0 : i32
    %2 = arith.cmpi ne, %1, %c0_i32_0 : i32
    scf.if %2 {
      %cst_37 = arith.constant 0.000000e+00 : f32
      %95 = vector.broadcast %cst_37 : f32 to vector<1x1xf32>
      %c0_38 = arith.constant 0 : index
      %c0_39 = arith.constant 0 : index
      %96 = vector.load %arg4[%c0_38, %c0_39] : memref<1x1xf32, #tpu.memory_space<vmem>>, vector<1x1xf32>
      tpu.vector_store %arg4[%c0_38, %c0_39], %95 {strides = array<i32>} : memref<1x1xf32, #tpu.memory_space<vmem>>, vector<1x1xf32>,
      %cst_40 = arith.constant 0.000000e+00 : f32
      %97 = vector.broadcast %cst_40 : f32 to vector<1x1xf32>
      %c0_41 = arith.constant 0 : index
      %c0_42 = arith.constant 0 : index
      %98 = vector.load %arg5[%c0_41, %c0_42] : memref<1x1xf32, #tpu.memory_space<vmem>>, vector<1x1xf32>
      tpu.vector_store %arg5[%c0_41, %c0_42], %97 {strides = array<i32>} : memref<1x1xf32, #tpu.memory_space<vmem>>, vector<1x1xf32>,
      %cst_43 = arith.constant 0.000000e+00 : f32
      %99 = vector.broadcast %cst_43 : f32 to vector<1x1xf32>
      %c0_44 = arith.constant 0 : index
      %c0_45 = arith.constant 0 : index
      %100 = vector.load %arg6[%c0_44, %c0_45] : memref<1x1xf32, #tpu.memory_space<vmem>>, vector<1x1xf32>
      tpu.vector_store %arg6[%c0_44, %c0_45], %99 {strides = array<i32>} : memref<1x1xf32, #tpu.memory_space<vmem>>, vector<1x1xf32>,
    } else {
    }
    %c0 = arith.constant 0 : index
    %c0_1 = arith.constant 0 : index
    %c0_2 = arith.constant 0 : index
    %3 = vector.load %arg1[%c0, %c0_1, %c0_2] : memref<1x2x128xf32, #tpu.memory_space<vmem>>, vector<1x2x128xf32>
    %4 = vector.shape_cast %3 : vector<1x2x128xf32> to vector<2x128xf32>
    %c0_3 = arith.constant 0 : index
    %c0_4 = arith.constant 0 : index
    %c0_5 = arith.constant 0 : index
    %5 = vector.load %arg2[%c0_3, %c0_4, %c0_5] : memref<1x2x128xf32, #tpu.memory_space<vmem>>, vector<1x2x128xf32>
    %6 = vector.shape_cast %5 : vector<1x2x128xf32> to vector<2x128xf32>
    %7 = math.absf %4 : vector<2x128xf32>
    %cst = arith.constant 0.000000e+00 : f32
    %8 = vector.broadcast %cst : f32 to vector<2x128xf32>
    %9 = arith.subf %8, %7 : vector<2x128xf32>
    %10 = math.exp %9 : vector<2x128xf32>
    %11 = math.log1p %10 : vector<2x128xf32>
    %cst_6 = arith.constant 0.000000e+00 : f32
    %12 = vector.broadcast %cst_6 : f32 to vector<2x128xf32>
    %13 = arith.minimumf %4, %12 : vector<2x128xf32>
    %14 = arith.subf %13, %11 : vector<2x128xf32>
    %cst_7 = arith.constant 0.000000e+00 : f32
    %15 = vector.broadcast %cst_7 : f32 to vector<2x128xf32>
    %16 = arith.subf %15, %4 : vector<2x128xf32>
    %cst_8 = arith.constant 0.000000e+00 : f32
    %17 = vector.broadcast %cst_8 : f32 to vector<2x128xf32>
    %18 = arith.minimumf %16, %17 : vector<2x128xf32>
    %19 = arith.subf %18, %11 : vector<2x128xf32>
    %cst_9 = arith.constant 1.000000e+00 : f32
    %20 = vector.broadcast %cst_9 : f32 to vector<2x128xf32>
    %21 = arith.addf %20, %10 : vector<2x128xf32>
    %cst_10 = arith.constant 1.000000e+00 : f32
    %22 = vector.broadcast %cst_10 : f32 to vector<2x128xf32>
    %23 = arith.divf %22, %21 : vector<2x128xf32>
    %cst_11 = arith.constant 0.000000e+00 : f32
    %24 = vector.broadcast %cst_11 : f32 to vector<2x128xf32>
    %25 = arith.cmpf oge, %4, %24 : vector<2x128xf32>
    %cst_12 = arith.constant 1.000000e+00 : f32
    %26 = vector.broadcast %cst_12 : f32 to vector<2x128xf32>
    %27 = arith.select %25, %26, %10 : vector<2x128xi1>, vector<2x128xf32>
    %28 = arith.mulf %27, %23 : vector<2x128xf32>
    %cst_13 = arith.constant 0.000000e+00 : f32
    %29 = vector.broadcast %cst_13 : f32 to vector<2x128xf32>
    %30 = arith.cmpf oge, %4, %29 : vector<2x128xf32>
    %cst_14 = arith.constant 1.000000e+00 : f32
    %31 = vector.broadcast %cst_14 : f32 to vector<2x128xf32>
    %32 = arith.select %30, %10, %31 : vector<2x128xi1>, vector<2x128xf32>
    %33 = arith.mulf %32, %23 : vector<2x128xf32>
    %34 = arith.mulf %33, %33 : vector<2x128xf32>
    %35 = arith.mulf %28, %28 : vector<2x128xf32>
    %36 = arith.mulf %6, %34 : vector<2x128xf32>
    %37 = arith.mulf %36, %14 : vector<2x128xf32>
    %cst_15 = arith.constant 1.000000e+00 : f32
    %38 = vector.broadcast %cst_15 : f32 to vector<2x128xf32>
    %39 = arith.subf %38, %6 : vector<2x128xf32>
    %40 = arith.mulf %39, %35 : vector<2x128xf32>
    %41 = arith.mulf %40, %19 : vector<2x128xf32>
    %42 = arith.addf %37, %41 : vector<2x128xf32>
    %cst_16 = arith.constant 0.000000e+00 : f32
    %43 = vector.broadcast %cst_16 : f32 to vector<2x128xf32>
    %44 = arith.subf %43, %42 : vector<2x128xf32>
    %45 = arith.mulf %6, %34 : vector<2x128xf32>
    %cst_17 = arith.constant 1.000000e+00 : f32
    %46 = vector.broadcast %cst_17 : f32 to vector<2x128xf32>
    %47 = arith.subf %46, %6 : vector<2x128xf32>
    %48 = arith.mulf %47, %35 : vector<2x128xf32>
    %49 = arith.addf %45, %48 : vector<2x128xf32>
    %50 = vector.shape_cast %4 : vector<2x128xf32> to vector<1x2x128xf32>
    %cst_18 = arith.constant dense<0x7F800000> : vector<1xf32>
    %51 = vector.multi_reduction <minimumf>, %50, %cst_18 [1, 2] : vector<1x2x128xf32> to vector<1xf32>
    %52 = vector.shape_cast %51 : vector<1xf32> to vector<1x1x1xf32>
    %53 = vector.extract %52[0, 0, 0] : f32 from vector<1x1x1xf32>
    %54 = vector.broadcast %53 : f32 to vector<1x1xf32>
    %55 = vector.shape_cast %4 : vector<2x128xf32> to vector<1x2x128xf32>
    %cst_19 = arith.constant dense<0xFF800000> : vector<1xf32>
    %56 = vector.multi_reduction <maximumf>, %55, %cst_19 [1, 2] : vector<1x2x128xf32> to vector<1xf32>
    %57 = vector.shape_cast %56 : vector<1xf32> to vector<1x1x1xf32>
    %58 = vector.extract %57[0, 0, 0] : f32 from vector<1x1x1xf32>
    %59 = vector.broadcast %58 : f32 to vector<1x1xf32>
    %60 = arith.subf %59, %54 : vector<1x1xf32>
    %cst_20 = arith.constant 8.000000e-01 : f32
    %61 = vector.broadcast %cst_20 : f32 to vector<1x1xf32>
    %62 = arith.mulf %61, %60 : vector<1x1xf32>
    %63 = arith.addf %54, %62 : vector<1x1xf32>
    %64 = vector.broadcast %63 : vector<1x1xf32> to vector<2x128xf32>
    %65 = arith.cmpf ogt, %4, %64 : vector<2x128xf32>
    %c0_21 = arith.constant 0 : index
    %c0_22 = arith.constant 0 : index
    %66 = vector.load %arg4[%c0_21, %c0_22] : memref<1x1xf32, #tpu.memory_space<vmem>>, vector<1x1xf32>
    %67 = vector.shape_cast %44 : vector<2x128xf32> to vector<1x2x128xf32>
    %cst_23 = arith.constant dense<0.000000e+00> : vector<1xf32>
    %68 = vector.multi_reduction <add>, %67, %cst_23 [1, 2] : vector<1x2x128xf32> to vector<1xf32>
    %69 = vector.shape_cast %68 : vector<1xf32> to vector<1x1x1xf32>
    %70 = vector.extract %69[0, 0, 0] : f32 from vector<1x1x1xf32>
    %71 = vector.broadcast %70 : f32 to vector<1x1xf32>
    %72 = arith.addf %66, %71 : vector<1x1xf32>
    %c0_24 = arith.constant 0 : index
    %c0_25 = arith.constant 0 : index
    %73 = vector.load %arg4[%c0_24, %c0_25] : memref<1x1xf32, #tpu.memory_space<vmem>>, vector<1x1xf32>
    tpu.vector_store %arg4[%c0_24, %c0_25], %72 {strides = array<i32>} : memref<1x1xf32, #tpu.memory_space<vmem>>, vector<1x1xf32>,
    %c0_26 = arith.constant 0 : index
    %c0_27 = arith.constant 0 : index
    %74 = vector.load %arg5[%c0_26, %c0_27] : memref<1x1xf32, #tpu.memory_space<vmem>>, vector<1x1xf32>
    %75 = vector.shape_cast %49 : vector<2x128xf32> to vector<1x2x128xf32>
    %cst_28 = arith.constant dense<0.000000e+00> : vector<1xf32>
    %76 = vector.multi_reduction <add>, %75, %cst_28 [1, 2] : vector<1x2x128xf32> to vector<1xf32>
    %77 = vector.shape_cast %76 : vector<1xf32> to vector<1x1x1xf32>
    %78 = vector.extract %77[0, 0, 0] : f32 from vector<1x1x1xf32>
    %79 = vector.broadcast %78 : f32 to vector<1x1xf32>
    %80 = arith.addf %74, %79 : vector<1x1xf32>
    %c0_29 = arith.constant 0 : index
    %c0_30 = arith.constant 0 : index
    %81 = vector.load %arg5[%c0_29, %c0_30] : memref<1x1xf32, #tpu.memory_space<vmem>>, vector<1x1xf32>
    tpu.vector_store %arg5[%c0_29, %c0_30], %80 {strides = array<i32>} : memref<1x1xf32, #tpu.memory_space<vmem>>, vector<1x1xf32>,
    %c0_31 = arith.constant 0 : index
    %c0_32 = arith.constant 0 : index
    %82 = vector.load %arg6[%c0_31, %c0_32] : memref<1x1xf32, #tpu.memory_space<vmem>>, vector<1x1xf32>
    %83 = arith.extui %65 : vector<2x128xi1> to vector<2x128xi32>
    %84 = arith.sitofp %83 : vector<2x128xi32> to vector<2x128xf32>
    %85 = vector.shape_cast %84 : vector<2x128xf32> to vector<1x2x128xf32>
    %cst_33 = arith.constant dense<0.000000e+00> : vector<1xf32>
    %86 = vector.multi_reduction <add>, %85, %cst_33 [1, 2] : vector<1x2x128xf32> to vector<1xf32>
    %87 = vector.shape_cast %86 : vector<1xf32> to vector<1x1x1xf32>
    %88 = vector.extract %87[0, 0, 0] : f32 from vector<1x1x1xf32>
    %89 = vector.broadcast %88 : f32 to vector<1x1xf32>
    %90 = arith.addf %82, %89 : vector<1x1xf32>
    %c0_34 = arith.constant 0 : index
    %c0_35 = arith.constant 0 : index
    %91 = vector.load %arg6[%c0_34, %c0_35] : memref<1x1xf32, #tpu.memory_space<vmem>>, vector<1x1xf32>
    tpu.vector_store %arg6[%c0_34, %c0_35], %90 {strides = array<i32>} : memref<1x1xf32, #tpu.memory_space<vmem>>, vector<1x1xf32>,
    %c1_i32 = arith.constant 1 : i32
    %92 = arith.cmpi eq, %arg0, %c1_i32 : i32
    %93 = arith.extui %92 : i1 to i32
    %c0_i32_36 = arith.constant 0 : i32
    %94 = arith.cmpi ne, %93, %c0_i32_36 : i32
    scf.if %94 {
      %c0_37 = arith.constant 0 : index
      %c0_38 = arith.constant 0 : index
      %95 = vector.load %arg6[%c0_37, %c0_38] : memref<1x1xf32, #tpu.memory_space<vmem>>, vector<1x1xf32>
      %cst_39 = arith.constant 5.120000e+02 : f32
      %96 = vector.broadcast %cst_39 : f32 to vector<1x1xf32>
      %97 = arith.divf %95, %96 : vector<1x1xf32>
      %cst_40 = arith.constant 1.000000e+00 : f32
      %98 = vector.broadcast %cst_40 : f32 to vector<1x1xf32>
      %99 = arith.subf %98, %97 : vector<1x1xf32>
      %cst_41 = arith.constant 1.500000e+00 : f32
      %100 = vector.broadcast %cst_41 : f32 to vector<1x1xf32>
      %101 = math.powf %99, %100 : vector<1x1xf32>
      %c0_42 = arith.constant 0 : index
      %c0_43 = arith.constant 0 : index
      %102 = vector.load %arg4[%c0_42, %c0_43] : memref<1x1xf32, #tpu.memory_space<vmem>>, vector<1x1xf32>
      %103 = arith.mulf %101, %102 : vector<1x1xf32>
      %c0_44 = arith.constant 0 : index
      %c0_45 = arith.constant 0 : index
      %104 = vector.load %arg5[%c0_44, %c0_45] : memref<1x1xf32, #tpu.memory_space<vmem>>, vector<1x1xf32>
      %105 = arith.divf %103, %104 : vector<1x1xf32>
      %c0_46 = arith.constant 0 : index
      %c0_47 = arith.constant 0 : index
      %106 = vector.load %arg3[%c0_46, %c0_47] : memref<1x1xf32, #tpu.memory_space<vmem>>, vector<1x1xf32>
      tpu.vector_store %arg3[%c0_46, %c0_47], %105 {strides = array<i32>} : memref<1x1xf32, #tpu.memory_space<vmem>>, vector<1x1xf32>,
    } else {
    }
    return
  }
  func.func @transform_0(%arg0: i32) -> (i32, i32, i32) {
    %c0_i32 = arith.constant 0 : i32
    %c0_i32_0 = arith.constant 0 : i32
    %c0_i32_1 = arith.constant 0 : i32
    return %arg0, %c0_i32, %c0_i32_0 : i32, i32, i32
  }
  func.func @transform_1(%arg0: i32) -> (i32, i32, i32) {
    %c0_i32 = arith.constant 0 : i32
    %c0_i32_0 = arith.constant 0 : i32
    %c0_i32_1 = arith.constant 0 : i32
    return %arg0, %c0_i32, %c0_i32_0 : i32, i32, i32
  }
  func.func @transform_2(%arg0: i32) -> (i32, i32) {
    %c0_i32 = arith.constant 0 : i32
    %c0_i32_0 = arith.constant 0 : i32
    %c0_i32_1 = arith.constant 0 : i32
    return %c0_i32, %c0_i32_0 : i32, i32
  }
}

</mosaic_0001>

<llo_original>
// kernel: tpu_custom_call.1
$region0: #{tpu_custom_call.1}
  #allocation0 [shape = 'u32[]', space=smem, size = 0x4, offset = 0x4, fixed_abs, tag = 'smem constant byte address 0x4 - core index']
  #allocation1 [shape = 'u32[144,128]{1,0:T(1,128)}', space=vmem, size = 0x12000, scoped, tag = 'internal scratch']
  #allocation2 [shape = 'f32[1,1]{1,0:T(1,128)}', space=vmem, size = 0x200, scoped, tag = 'scratch operand']
  #allocation3 [shape = 'f32[1,1]{1,0:T(1,128)}', space=vmem, size = 0x200, scoped, tag = 'scratch operand']
  #allocation4 [shape = 'f32[1,1]{1,0:T(1,128)}', space=vmem, size = 0x200, scoped, tag = 'scratch operand']
  %s0 = inlined_call_operand.hbm [shape: f32[2,2,128], index: 0, kind: input, shape index: {}]
  %s1 = inlined_call_operand.hbm [shape: f32[2,2,128], index: 1, kind: input, shape index: {}]
  %s2 = inlined_call_operand.hbm [shape: f32[1,1], index: 2, kind: output, shape index: {}]
  %s3 = sld [smem:[#allocation0]]
  $region57: #{tpu_custom_call.1} parent=0
    _
  %s5 = ssub.s32 1, %s3
  %s6 = scalar_select 0, %s5, %s3
  $region1: #{tpu_custom_call.1} parent=0
    #allocation5 [shape = 'u8[2048]{0}', space=vmem, size = 0x800, scoped, tag = 'input window, operand 0']
    #allocation6 [shape = 's32[2]{0}', space=sflag, size = 0x8, scoped, tag = 'scoped memory for tpu_custom_call.1']
    #allocation7 [shape = 's32[2]{0}', space=sflag, size = 0x8, scoped, tag = 'scoped memory for tpu_custom_call.1']
    #allocation8 [shape = 'u8[2048]{0}', space=vmem, size = 0x800, scoped, tag = 'input window, operand 1']
    #allocation9 [shape = 's32[2]{0}', space=sflag, size = 0x8, scoped, tag = 'scoped memory for tpu_custom_call.1']
    #allocation10 [shape = 'u8[512]{0}', space=vmem, size = 0x400, scoped, tag = 'output window, operand 0, single buffered']
    %7 = vsyncpa [#allocation6], 0
    %s8 = scalar_lea.sflag [#allocation6], 1
    %9 = vsyncpa %s8, 0
    %10 = vsyncpa [#allocation9], 0
    %s11 = scalar_lea.sflag [#allocation9], 1
    %12 = vsyncpa %s11, 0
    %13 = vsyncpa [#allocation7], 0
    loop: start=0, step=1, limit=4
    $region2: #{tpu_custom_call.1} parent=1 // loop_pre_header
      _
    $region3: #{tpu_custom_call.1} parent=1 // loop_header
      %s15 = sphi 0, %s19
      %p16 = scmp.ge.s32.totalorder %s15, 4
      %s25 = sphi 0, %s27
      %s28 = sphi 0, %s25
      %s29 = sphi 0, %s28
      %s45 = sphi 0, %s29
      %s51 = sphi 0, %s53
      %s54 = sphi 0, %s51
      %s55 = sphi 0, %s54
      %s71 = sphi 0, %s55
      %s75 = sphi 0, %s75
      %s77 = sphi 0, %s75
      %s78 = sphi 0, %s77
      %s92 = sphi 0, %s78
    $region4: #{tpu_custom_call.1} parent=1 // loop_header_branch
      %18 = sbr.rel (%p16) target = $region8
    $region5: #{tpu_custom_call.1} parent=1 // loop_body
      %s20 = ssub.s32 %s15, 1
      %s21 = ssub.s32 %s15, 2
      %s22 = sadd.s32 %s15, 1
      %s23 = ssub.s32 %s15, %s22
      %p24 = scmp.eq.s32.totalorder %s23, 0
      %s26 = sadd.s32 %s25, 1
      %s27 = scalar_select %p24, %s25, %s26
      %p30 = pneg %p24
      %p31 = scmp.eq.s32.totalorder %s15, 1
      %p32 = por %p30, %p31
      %p33 = scmp.ne.s32.totalorder %s25, %s28
      %p34 = scmp.eq.s32.totalorder %s15, 0
      %p35 = por %p33, %p34
      %p36 = scmp.ne.s32.totalorder %s25, %s28
      %p37 = scmp.eq.s32.totalorder %s20, 1
      %p38 = por %p36, %p37
      %p39 = scmp.ne.s32.totalorder %s28, %s29
      %p40 = scmp.eq.s32.totalorder %s20, 0
      %p41 = por %p39, %p40
      %p42 = scmp.ne.s32.totalorder %s28, %s29
      %p43 = scmp.eq.s32.totalorder %s21, 1
      %p44 = por %p42, %p43
      %p46 = scmp.ne.s32.totalorder %s29, %s45
      %p47 = scmp.eq.s32.totalorder %s21, 0
      %p48 = por %p46, %p47
      %s49 = ssub.s32 %s15, %s22
      %p50 = scmp.eq.s32.totalorder %s49, 0
      %s52 = sadd.s32 %s51, 1
      %s53 = scalar_select %p50, %s51, %s52
      %p56 = pneg %p50
      %p57 = scmp.eq.s32.totalorder %s15, 1
      %p58 = por %p56, %p57
      %p59 = scmp.ne.s32.totalorder %s51, %s54
      %p60 = scmp.eq.s32.totalorder %s15, 0
      %p61 = por %p59, %p60
      %p62 = scmp.ne.s32.totalorder %s51, %s54
      %p63 = scmp.eq.s32.totalorder %s20, 1
      %p64 = por %p62, %p63
      %p65 = scmp.ne.s32.totalorder %s54, %s55
      %p66 = scmp.eq.s32.totalorder %s20, 0
      %p67 = por %p65, %p66
      %p68 = scmp.ne.s32.totalorder %s54, %s55
      %p69 = scmp.eq.s32.totalorder %s21, 1
      %p70 = por %p68, %p69
      %p72 = scmp.ne.s32.totalorder %s55, %s71
      %p73 = scmp.eq.s32.totalorder %s21, 0
      %p74 = por %p72, %p73
      %s76 = sadd.s32 %s75, 1
      %p79 = scmp.eq.s32.totalorder %s15, 1
      %p80 = scmp.ne.s32.totalorder %s75, %s77
      %p81 = scmp.eq.s32.totalorder %s15, 0
      %p82 = por %p80, %p81
      %p83 = scmp.ne.s32.totalorder %s75, %s77
      %p84 = scmp.eq.s32.totalorder %s20, 1
      %p85 = por %p83, %p84
      %p86 = scmp.ne.s32.totalorder %s77, %s78
      %p87 = scmp.eq.s32.totalorder %s20, 0
      %p88 = por %p86, %p87
      %p89 = scmp.ne.s32.totalorder %s77, %s78
      %p90 = scmp.eq.s32.totalorder %s21, 1
      %p91 = por %p89, %p90
      %p93 = scmp.ne.s32.totalorder %s78, %s92
      %p94 = scmp.eq.s32.totalorder %s21, 0
      %p95 = por %p93, %p94
      %p96 = scmp.le.s32.totalorder 1, %s15
      %p97 = scmp.lt.s32.totalorder %s15, 3
      %p98 = pnand %p96, %p97
      %p99 = pneg %p98
      // Predicated region
      $region9: #{tpu_custom_call.1} parent=5 // pred_check
        _
      $region10: #{tpu_custom_call.1} parent=5 // pred_check_branch
        %101 = sbr.rel (%p98) target = $region12
      $region11: #{tpu_custom_call.1} parent=5 // pred_region
        %s102 = ssub.s32 %s15, 1
      $region12: #{tpu_custom_call.1} parent=5 // pred_fallthru
        _
      %p103 = scmp.lt.s32.totalorder %s15, 2
      // Predicated region
      $region13: #{tpu_custom_call.1} parent=5 // pred_check
        %p104 = pneg %p103
      $region14: #{tpu_custom_call.1} parent=5 // pred_check_branch
        %106 = sbr.rel (%p104) target = $region16
      $region15: #{tpu_custom_call.1} parent=5 // pred_region
        // Predicated region
        $region17: #{tpu_custom_call.1} parent=15 // pred_check
          %p107 = pneg %p35
        $region18: #{tpu_custom_call.1} parent=15 // pred_check_branch
          %109 = sbr.rel (%p107) target = $region20
        $region19: #{tpu_custom_call.1} parent=15 // pred_region
          %s110 = sand.u32 %s25, 1
          %s111 = scalar_lea.sflag [#allocation6], %s110
          %s112 = sand.u32 %s25, 1
          %s113 = smul.addr %s112, 2
          %s114 = scalar_lea.vmem [#allocation5], %s113
          %s116 = ssub.s32 32, 32
          %117 = vsyncadd %s111, %s116
          %s118 = smul.addr %s15, 32
          %s119 = scalar_lea.hbm %s0, %s118
          %s121 = sshll.u32 %s114, 4
          %s122 = int_to_ptr.vmem [resolvable:$true] %s121
          %124 = dma.hbm_to_vmem [thread:$0]  %s119, 32, %s122, %s111
        $region20: #{tpu_custom_call.1} parent=15 // pred_fallthru
          _
        // Predicated region
        $region21: #{tpu_custom_call.1} parent=15 // pred_check
          %p125 = pneg %p61
        $region22: #{tpu_custom_call.1} parent=15 // pred_check_branch
          %127 = sbr.rel (%p125) target = $region24
        $region23: #{tpu_custom_call.1} parent=15 // pred_region
          %s128 = sand.u32 %s51, 1
          %s129 = scalar_lea.sflag [#allocation9], %s128
          %s130 = sand.u32 %s51, 1
          %s131 = smul.addr %s130, 2
          %s132 = scalar_lea.vmem [#allocation8], %s131
          %s134 = ssub.s32 32, 32
          %135 = vsyncadd %s129, %s134
          %s136 = smul.addr %s15, 32
          %s137 = scalar_lea.hbm %s1, %s136
          %s139 = sshll.u32 %s132, 4
          %s140 = int_to_ptr.vmem [resolvable:$true] %s139
          %142 = dma.hbm_to_vmem [thread:$0]  %s137, 32, %s140, %s129
        $region24: #{tpu_custom_call.1} parent=15 // pred_fallthru
          _
      $region16: #{tpu_custom_call.1} parent=5 // pred_fallthru
        _
      %p143 = scmp.le.s32.totalorder 1, %s15
      %p144 = scmp.lt.s32.totalorder %s15, 3
      %p145 = pnand %p143, %p144
      %p146 = pneg %p145
      // Predicated region
      $region25: #{tpu_custom_call.1} parent=5 // pred_check
        _
      $region26: #{tpu_custom_call.1} parent=5 // pred_check_branch
        %148 = sbr.rel (%p145) target = $region28
      $region27: #{tpu_custom_call.1} parent=5 // pred_region
        %s149 = ssub.s32 %s15, 1
        %s150 = sand.u32 %s28, 1
        %s151 = scalar_lea.sflag [#allocation6], %s150
        %s152 = sand.u32 %s28, 1
        %s153 = smul.addr %s152, 2
        %s154 = scalar_lea.vmem [#allocation5], %s153
        // Predicated region
        $region29: #{tpu_custom_call.1} parent=27 // pred_check
          %p155 = pneg %p41
        $region30: #{tpu_custom_call.1} parent=27 // pred_check_branch
          %157 = sbr.rel (%p155) target = $region32
        $region31: #{tpu_custom_call.1} parent=27 // pred_region
          %158 = dma.done %s151, 32
        $region32: #{tpu_custom_call.1} parent=27 // pred_fallthru
          _
        %s159 = sand.u32 %s54, 1
        %s160 = scalar_lea.sflag [#allocation9], %s159
        %s161 = sand.u32 %s54, 1
        %s162 = smul.addr %s161, 2
        %s163 = scalar_lea.vmem [#allocation8], %s162
        // Predicated region
        $region33: #{tpu_custom_call.1} parent=27 // pred_check
          %p164 = pneg %p67
        $region34: #{tpu_custom_call.1} parent=27 // pred_check_branch
          %166 = sbr.rel (%p164) target = $region36
        $region35: #{tpu_custom_call.1} parent=27 // pred_region
          %167 = dma.done %s160, 32
        $region36: #{tpu_custom_call.1} parent=27 // pred_fallthru
          _
        %s168 = sand.u32 %s28, 1
        %s169 = scalar_lea.sflag [#allocation6], %s168
        %s170 = sand.u32 %s28, 1
        %s171 = smul.addr %s170, 2
        %s172 = scalar_lea.vmem [#allocation5], %s171
        %p173 = pneg %p41
        %p174 = pneg %p38
        %s175 = sand.u32 %s54, 1
        %s176 = scalar_lea.sflag [#allocation9], %s175
        %s177 = sand.u32 %s54, 1
        %s178 = smul.addr %s177, 2
        %s179 = scalar_lea.vmem [#allocation8], %s178
        %p180 = pneg %p67
        %p181 = pneg %p64
        %p182 = pneg %p88
        %p183 = pneg %p85
        %p184 = scmp.eq.s32.totalorder %s20, 0
        // Predicated region
        $region37: #{tpu_custom_call.1} parent=27 // pred_check
          %p185 = pneg %p184
        $region38: #{tpu_custom_call.1} parent=27 // pred_check_branch
          %187 = sbr.rel (%p185) target = $region40
        $region39: #{tpu_custom_call.1} parent=27 // pred_region
          %vm188 = vcmask 0
          %189 = vst.msk [vmem:[#allocation2] sm:$0x1] %vm188, 0.0
          %190 = vst.msk [vmem:[#allocation3] sm:$0x1] %vm188, 0.0
          %191 = vst.msk [vmem:[#allocation4] sm:$0x1] %vm188, 0.0
        $region40: #{tpu_custom_call.1} parent=27 // pred_fallthru
          _
        %v192 = vld [vmem:[%s154] sm:$0x3]
        %v193 = vld [vmem:[%s163] sm:$0x3]
        %v194 = vand.u32 2147483647, %v192
        %v195 = vsub.f32 0.0, %v194
        %v196 = vmul.f32 %v195, 1.442695
        %v197 = vpow.pop %v196
        %v198 = vadd.f32 %v197, 1.0
        %v199 = vlog2.pop %v198
        %v200 = vmul.f32 %v199, 0.6931472
        %v201 = vmul.f32 -0.5, %v197
        %v202 = vadd.f32 %v201, 1.0
        %v203 = vmul.f32 %v202, %v197
        %v204 = vand.u32 2147483647, %v197
        %vm205 = vcmp.lt.f32.partialorder %v204, 0.0004427343
        %v206 = vsel %vm205, %v203, %v200
        %v207 = vmin.f32 %v192, 0.0
        %v208 = vsub.f32 %v207, %v206
        %v209 = vsub.f32 0.0, %v192
        %v210 = vmin.f32 %v209, 0.0
        %v211 = vsub.f32 %v210, %v206
        %v212 = vadd.f32 %v197, 1.0
        %v213 = vrcp.pop %v212
        %v214 = vmul.f32 1.0, %v213
        %vm215 = vcmp.ge.f32.partialorder %v192, 0.0
        %v216 = vsel %vm215, 1.0, %v197
        %v217 = vmul.f32 %v216, %v214
        %v218 = vsel %vm215, %v197, 1.0
        %v219 = vmul.f32 %v218, %v214
        %v220 = vmul.f32 %v219, %v219
        %v221 = vmul.f32 %v217, %v217
        %v222 = vmul.f32 %v193, %v220
        %v223 = vmul.f32 %v222, %v208
        %v224 = vsub.f32 1.0, %v193
        %v225 = vmul.f32 %v224, %v221
        %v226 = vmul.f32 %v225, %v211
        %v227 = vadd.f32 %v223, %v226
        %v228 = vsub.f32 0.0, %v227
        %v229 = vadd.f32 %v222, %v225
        %vm230 = vcmask 1041408
        %v231 = vsel %vm230, %v192, inf
        %232 = vmin.xlane.f32.xlu0 %v231
        %v233 = vpop.xlane.xlu0 %232
        %v234 = vrot.slane %v233, 4
        %v235 = vmin.f32 %v233, %v234
        %v236 = vrot.slane %v235, 2
        %v237 = vmin.f32 %v235, %v236
        %v238 = vrot.slane %v237, 1
        %v239 = vmin.f32 %v237, %v238
        %s240 = vtos %v239
        %v241 = vstv %s240
        %v242 = vsel %vm230, %v192, -inf
        %243 = vmax.xlane.f32.xlu0 %v242
        %v244 = vpop.xlane.xlu0 %243
        %v245 = vrot.slane %v244, 4
        %v246 = vmax.f32 %v244, %v245
        %v247 = vrot.slane %v246, 2
        %v248 = vmax.f32 %v246, %v247
        %v249 = vrot.slane %v248, 1
        %v250 = vmax.f32 %v248, %v249
        %s251 = vtos %v250
        %v252 = vstv %s251
        %v253 = vsub.f32 %v252, %v241
        %v254 = vmul.f32 %v253, 0.8
        %v255 = vadd.f32 %v241, %v254
        %vm256 = vcmp.gt.f32.partialorder %v192, %v255
        %v257 = vld [vmem:[#allocation2] sm:$0x1]
        %v258 = vsel %vm230, %v228, 0.0
        %259 = vadd.xlane.f32.xlu0 %v258
        %v260 = vpop.xlane.xlu0 %259
        %v261 = vrot.slane %v260, 4
        %v262 = vadd.f32 %v260, %v261
        %v263 = vrot.slane %v262, 2
        %v264 = vadd.f32 %v262, %v263
        %v265 = vrot.slane %v264, 1
        %v266 = vadd.f32 %v264, %v265
        %s267 = vtos %v266
        %v268 = vstv %s267
        %v269 = vadd.f32 %v257, %v268
        %vm270 = vcmask 0
        %271 = vst.msk [vmem:[#allocation2] sm:$0x1] %vm270, %v269
        %v272 = vld [vmem:[#allocation3] sm:$0x1]
        %v273 = vsel %vm230, %v229, 0.0
        %274 = vadd.xlane.f32.xlu0 %v273
        %v275 = vpop.xlane.xlu0 %274
        %v276 = vrot.slane %v275, 4
        %v277 = vadd.f32 %v275, %v276
        %v278 = vrot.slane %v277, 2
        %v279 = vadd.f32 %v277, %v278
        %v280 = vrot.slane %v279, 1
        %v281 = vadd.f32 %v279, %v280
        %s282 = vtos %v281
        %v283 = vstv %s282
        %v284 = vadd.f32 %v272, %v283
        %285 = vst.msk [vmem:[#allocation3] sm:$0x1] %vm270, %v284
        %v286 = vld [vmem:[#allocation4] sm:$0x1]
        %v287 = vsel %vm256, 1, 0
        %v288 = vcvt.s32.f32 %v287
        %v289 = vsel %vm230, %v288, 0.0
        %290 = vadd.xlane.f32.xlu0 %v289
        %v291 = vpop.xlane.xlu0 %290
        %v292 = vrot.slane %v291, 4
        %v293 = vadd.f32 %v291, %v292
        %v294 = vrot.slane %v293, 2
        %v295 = vadd.f32 %v293, %v294
        %v296 = vrot.slane %v295, 1
        %v297 = vadd.f32 %v295, %v296
        %s298 = vtos %v297
        %v299 = vstv %s298
        %v300 = vadd.f32 %v286, %v299
        %301 = vst.msk [vmem:[#allocation4] sm:$0x1] %vm270, %v300
        %p302 = scmp.eq.s32.totalorder %s20, 1
        // Predicated region
        $region41: #{tpu_custom_call.1} parent=27 // pred_check
          %p303 = pneg %p302
        $region42: #{tpu_custom_call.1} parent=27 // pred_check_branch
          %305 = sbr.rel (%p303) target = $region44
        $region43: #{tpu_custom_call.1} parent=27 // pred_region
          %v306 = vld [vmem:[#allocation4] sm:$0x1]
          %v307 = vrcp.pop 512.0
          %v308 = vmul.f32 %v306, %v307
          %v309 = vsub.f32 1.0, %v308
          %v310 = vpow.f32 %v309, 1.5
          %v311 = vld [vmem:[#allocation2] sm:$0x1]
          %v312 = vmul.f32 %v310, %v311
          %v313 = vld [vmem:[#allocation3] sm:$0x1]
          %v314 = vrcp.pop %v313
          %v315 = vmul.f32 %v312, %v314
          %316 = vst.msk [vmem:[#allocation10] sm:$0x1] %vm270, %v315
        $region44: #{tpu_custom_call.1} parent=27 // pred_fallthru
          _
        // Predicated region
        $region45: #{tpu_custom_call.1} parent=27 // pred_check
          %p317 = pneg %p85
        $region46: #{tpu_custom_call.1} parent=27 // pred_check_branch
          %319 = sbr.rel (%p317) target = $region48
        $region47: #{tpu_custom_call.1} parent=27 // pred_region
          %s321 = ssub.s32 16, 16
          %322 = vsyncadd [#allocation7], %s321
          %s324 = sshll.u32 [#allocation10], 4
          %s325 = int_to_ptr.vmem [resolvable:$true] %s324
          %327 = dma.vmem_to_hbm [thread:$0]  %s325, 16, %s2, [#allocation7]
        $region48: #{tpu_custom_call.1} parent=27 // pred_fallthru
          _
        // Predicated region
        $region49: #{tpu_custom_call.1} parent=27 // pred_check
          %p328 = pneg %p85
        $region50: #{tpu_custom_call.1} parent=27 // pred_check_branch
          %330 = sbr.rel (%p328) target = $region52
        $region51: #{tpu_custom_call.1} parent=27 // pred_region
          %331 = dma.done [#allocation7], 16
        $region52: #{tpu_custom_call.1} parent=27 // pred_fallthru
          _
      $region28: #{tpu_custom_call.1} parent=5 // pred_fallthru
        _
      %p332 = scmp.le.s32.totalorder 2, %s15
      // Predicated region
      $region53: #{tpu_custom_call.1} parent=5 // pred_check
        %p333 = pneg %p332
      $region54: #{tpu_custom_call.1} parent=5 // pred_check_branch
        %335 = sbr.rel (%p333) target = $region56
      $region55: #{tpu_custom_call.1} parent=5 // pred_region
        %s336 = ssub.s32 %s15, 2
      $region56: #{tpu_custom_call.1} parent=5 // pred_fallthru
        _
    $region6: #{tpu_custom_call.1} parent=1 // loop_footer
      %s19 = sadd.s32 1, %s15
    $region7: #{tpu_custom_call.1} parent=1 // loop_footer_branch
      %14 = sbr.rel target = $region3
    $region8: #{tpu_custom_call.1} parent=1 // loop_exit
      _
    %337 = vsyncpa [#allocation6], 1
    %s338 = scalar_lea.sflag [#allocation6], 1
    %339 = vsyncpa %s338, 1
    %340 = vsyncpa [#allocation9], 1
    %s341 = scalar_lea.sflag [#allocation9], 1
    %342 = vsyncpa %s341, 1
    %343 = vsyncpa [#allocation7], 1
    %s344 = scalar_lea.sflag [#allocation7], 1
    %345 = vsyncpa %s344, 1

</llo_original>
